<compile_context>
chip_gen: v7x
topology: tpu7x:2x2x1
jax: 0.10.0
libtpu: 0.0.40
codegen_flags: <defaults>
</compile_context>

<pallas_src>
import jax
import jax.numpy as jnp
from jax.experimental import pallas as pl
from jax.experimental.pallas import tpu as pltpu


def _copy_rows_kernel(x_ref, o_ref):
    # Lane-dense identity copy of a (row_tile, H*W) slab: full-width vector
    # stores, no masked vst.msk, no per-channel slicing.
    o_ref[...] = x_ref[...]


def _identity_copy_2d(flat):
    """Identity copy of a 2-D lane-dense view, output aliased onto the input."""
    rows, cols = flat.shape
    # Row tile: whole array when small (block dims equal to full dims are always
    # legal); otherwise a sublane-aligned tile so (in + out) double buffers stay
    # well inside scoped VMEM on v7x (64 MiB physical).
    if rows <= 256:
        row_tile = rows
    else:
        row_tile = 256  # divisible by 8 -> legal sublane tiling
    grid = (pl.cdiv(rows, row_tile),)

    return pl.pallas_call(
        _copy_rows_kernel,
        out_shape=jax.ShapeDtypeStruct((rows, cols), flat.dtype),
        grid=grid,
        in_specs=[pl.BlockSpec((row_tile, cols), lambda i: (i, 0))],
        out_specs=pl.BlockSpec((row_tile, cols), lambda i: (i, 0)),
        # The "concatenated" result is bit-identical to the input, so let the
        # output alias the input buffer and avoid a second HBM allocation.
        input_output_aliases={0: 0},
        compiler_params=pltpu.CompilerParams(
            dimension_semantics=("parallel",)),
    )(flat)


@jax.jit
def model_forward(v1):
    """Mirrors Model.forward:
        split_tensors = torch.split(v1, [1, 1, 1], dim=1)
        concatenated_tensor = torch.cat(split_tensors, dim=1)
        return (concatenated_tensor, split_tensors)
    """
    N, C, H, W = v1.shape
    assert C == 3, "torch.split(v1, [1,1,1], dim=1) requires 3 channels"

    # Lane-dense view: minor dim is H*W (contiguous in NCHW), so the copy uses
    # full-width vector loads/stores instead of 16-lane masked ones.
    flat = v1.reshape(N * C, H * W)
    concatenated = _identity_copy_2d(flat).reshape(N, C, H, W)

    # Splits are cheap slices of the (identical) concatenated tensor; kept lazy
    # inside the jit so XLA can fuse or elide them if the caller ignores them.
    splits = tuple(concatenated[:, c:c + 1, :, :] for c in range(C))
    return concatenated, splits


if __name__ == "__main__":
    key = jax.random.PRNGKey(0)
    # torch.split(v1, [1,1,1], dim=1) requires exactly 3 channels.
    x = jax.random.normal(key, (2, 3, 16, 16), dtype=jnp.float32)

    concat_out, splits = model_forward(x)
    jax.block_until_ready(concat_out)
    for s in splits:
        jax.block_until_ready(s)

    # Sanity: split+cat along the same axis is the identity.
    assert concat_out.shape == (2, 3, 16, 16)
    assert all(s.shape == (2, 1, 16, 16) for s in splits)
    assert jnp.array_equal(concat_out, x)
    assert jnp.array_equal(jnp.concatenate(splits, axis=1), x)

    print("KERNEL_OK")
</pallas_src>

<mosaic_0001>
module attributes {stable_mosaic.version = 11 : i64} {
  func.func @_copy_rows_kernel(%arg0: i32, %arg1: memref<6x256xf32, #tpu.memory_space<vmem>>, %arg2: memref<6x256xf32, #tpu.memory_space<vmem>>) attributes {dimension_semantics = [#tpu.dimension_semantics<parallel>], iteration_bounds = array<i64: 1>, scalar_prefetch = 0 : i64, scratch_operands = 0 : i64, tpu.core_type = #tpu.core_type<tc>, window_params = [{transform_indices = @transform_0, window_bounds = array<i64: 6, 256>}, {transform_indices = @transform_1, window_bounds = array<i64: 6, 256>}]} {
    %c0 = arith.constant 0 : index
    %c0_0 = arith.constant 0 : index
    %0 = vector.load %arg1[%c0, %c0_0] : memref<6x256xf32, #tpu.memory_space<vmem>>, vector<6x256xf32>
    %c0_1 = arith.constant 0 : index
    %c0_2 = arith.constant 0 : index
    %1 = vector.load %arg2[%c0_1, %c0_2] : memref<6x256xf32, #tpu.memory_space<vmem>>, vector<6x256xf32>
    tpu.vector_store %arg2[%c0_1, %c0_2], %0 {strides = array<i32>} : memref<6x256xf32, #tpu.memory_space<vmem>>, vector<6x256xf32>,
    return
  }
  func.func @transform_0(%arg0: i32) -> (i32, i32) {
    %c0_i32 = arith.constant 0 : i32
    %c0_i32_0 = arith.constant 0 : i32
    return %arg0, %c0_i32 : i32, i32
  }
  func.func @transform_1(%arg0: i32) -> (i32, i32) {
    %c0_i32 = arith.constant 0 : i32
    %c0_i32_0 = arith.constant 0 : i32
    return %arg0, %c0_i32 : i32, i32
  }
}

</mosaic_0001>

<llo_original>
// kernel: model_forward.1
$region0: #{model_forward.1}
  #allocation0 [shape = 'u32[]', space=smem, size = 0x4, offset = 0x4, fixed_abs, tag = 'smem constant byte address 0x4 - core index']
  #allocation1 [shape = 'u32[144,128]{1,0:T(1,128)}', space=vmem, size = 0x12000, scoped, tag = 'internal scratch']
  %s0 = inlined_call_operand.vmem [shape: f32[6,256], index: 0, kind: input, shape index: {}, may-alias: {0,1}]
  %s1 = inlined_call_operand.vmem [shape: f32[6,256], index: 1, kind: output, shape index: {}, may-alias: {0,1}]
  %s2 = sld [smem:[#allocation0]]
  $region14: #{model_forward.1} parent=0
    _
  %s4 = ssub.s32 1, %s2
  %s5 = scalar_select 0, %s4, %s2
  // Predicated region
  $region2: #{model_forward.1} parent=0 // pred_check
    _
  $region3: #{model_forward.1} parent=0 // pred_check_branch
    %7 = sbr.rel (0) target = $region5
  $region4: #{model_forward.1} parent=0 // pred_region
    _
  $region5: #{model_forward.1} parent=0 // pred_fallthru
    _
  %v8 = vld [vmem:[%s0] sm:$0x3f]
  %v9 = vld [vmem:[%s0 + $0x8] sm:$0x3f]
  %10 = vst [vmem:[%s1] sm:$0x3f] %v8
  %11 = vst [vmem:[%s1 + $0x8] sm:$0x3f] %v9
  // Predicated region
  $region6: #{model_forward.1} parent=0 // pred_check
    _
  $region7: #{model_forward.1} parent=0 // pred_check_branch
    %13 = sbr.rel (0) target = $region9
  $region8: #{model_forward.1} parent=0 // pred_region
    _
  $region9: #{model_forward.1} parent=0 // pred_fallthru
    _
  // Predicated region
  $region10: #{model_forward.1} parent=0 // pred_check
    _
  $region11: #{model_forward.1} parent=0 // pred_check_branch
    %15 = sbr.rel (0) target = $region13
  $region12: #{model_forward.1} parent=0 // pred_region
    _
  $region13: #{model_forward.1} parent=0 // pred_fallthru
    _

</llo_original>
